<compile_context>
chip_gen: v7x
topology: tpu7x:2x2x1
jax: 0.10.0
libtpu: 0.0.40
codegen_flags: <defaults>
</compile_context>

<pallas_src>
import jax
import jax.numpy as jnp
from jax.experimental import pallas as pl
from jax.experimental.pallas import tpu as pltpu


def mlp_kernel(x_ref,
               w1_ref, b1_ref,
               w2_ref, b2_ref,
               w3_ref, b3_ref,
               w4_ref, b4_ref,
               w5_ref, b5_ref,
               o_ref):
    """One batch tile of the 5-layer MLP (bf16 MXU inputs, f32 accumulation)."""
    z = x_ref[...]  # bf16, fed straight to the MXU
    for w_ref, b_ref in ((w1_ref, b1_ref), (w2_ref, b2_ref),
                         (w3_ref, b3_ref), (w4_ref, b4_ref)):
        h = jnp.dot(z, w_ref[...], preferred_element_type=jnp.float32) + b_ref[...]
        z = jnp.maximum(h, 0.0).astype(jnp.bfloat16)   # one cast per layer

    logits = jnp.dot(z, w5_ref[...],
                     preferred_element_type=jnp.float32) + b5_ref[...]

    # log_softmax over the real class columns only (no lane padding).
    m = jnp.max(logits, axis=-1, keepdims=True)
    shifted = logits - m
    lse = jnp.log(jnp.sum(jnp.exp(shifted), axis=-1, keepdims=True))
    o_ref[...] = shifted - lse   # small (tb, n_classes) store; ~64x fewer bytes
    # NOTE: self.dropout is defined in __init__ but never applied in forward(),
    # so it is intentionally omitted here.


def _round_up(n, m):
    return ((n + m - 1) // m) * m


def classifier_forward(x, params, *, block_batch=2048):
    """params: list of (W, b) with W shaped (in, out) and b shaped (1, out), f32."""
    batch, in_features = x.shape
    n_classes = params[-1][0].shape[1]

    # --- batch tiling: multiple-of-16 tiles (bf16 packed sublanes) ------------
    block_batch = max(16, _round_up(block_batch, 16))
    full = _round_up(batch, 16)
    tb = min(block_batch, full)
    # v7x has 2 TensorCores: keep >= 2 grid steps when the batch allows it so
    # the "parallel" batch axis can be sharded (no-op on v5e/v6e).
    if tb == full and batch >= 32:
        tb = max(16, _round_up(full // 2, 16))
    padded_batch = _round_up(batch, tb)
    if padded_batch != batch:
        x = jnp.pad(x, ((0, padded_batch - batch), (0, 0)))

    # --- bf16 activations & weights (MXU fast path), f32 biases ---------------
    x_bf16 = x.astype(jnp.bfloat16)
    ws = [w.astype(jnp.bfloat16) for w, _ in params]
    bs = [b.astype(jnp.float32) for _, b in params]

    flat_args = [x_bf16]
    for w, b in zip(ws, bs):
        flat_args += [w, b]

    grid = (padded_batch // tb,)

    x_spec = pl.BlockSpec((tb, in_features), lambda i: (i, 0))
    out_spec = pl.BlockSpec((tb, n_classes), lambda i: (i, 0))
    # Weights/biases: full-array blocks with a constant index_map -> fetched
    # once and reused from VMEM for every batch tile (pipeline streams x only).
    resident = lambda arr: pl.BlockSpec(arr.shape, lambda i: (0,) * arr.ndim)
    in_specs = [x_spec] + [resident(a) for a in flat_args[1:]]

    out = pl.pallas_call(
        mlp_kernel,
        out_shape=jax.ShapeDtypeStruct((padded_batch, n_classes), jnp.float32),
        grid=grid,
        in_specs=in_specs,
        out_specs=out_spec,
        compiler_params=pltpu.CompilerParams(
            dimension_semantics=("parallel",)),
    )(*flat_args)

    return out[:batch]


def init_linear(key, fan_in, fan_out):
    """Deterministic init mimicking torch.nn.Linear default (uniform +/- 1/sqrt(fan_in))."""
    kw, kb = jax.random.split(key)
    bound = 1.0 / (fan_in ** 0.5)
    w = jax.random.uniform(kw, (fan_in, fan_out), jnp.float32, -bound, bound)
    b = jax.random.uniform(kb, (1, fan_out), jnp.float32, -bound, bound)
    return w, b


def make_params(key, input_size, o1=10, o2=10, o3=10, o4=10, n_classes=2):
    dims = [(input_size, o1), (o1, o2), (o2, o3), (o3, o4), (o4, n_classes)]
    keys = jax.random.split(key, len(dims))
    return [init_linear(k, fi, fo) for k, (fi, fo) in zip(keys, dims)]


def reference_forward(x, params):
    """Pure-JAX reference with the same bf16 quantization of x / W / activations."""
    z = x.astype(jnp.bfloat16)
    for w, b in params[:-1]:
        h = jnp.dot(z, w.astype(jnp.bfloat16),
                    preferred_element_type=jnp.float32) + b
        z = jnp.maximum(h, 0.0).astype(jnp.bfloat16)
    w5, b5 = params[-1]
    logits = jnp.dot(z, w5.astype(jnp.bfloat16),
                     preferred_element_type=jnp.float32) + b5
    return jax.nn.log_softmax(logits, axis=1)


if __name__ == "__main__":
    key = jax.random.PRNGKey(0)
    k_x, k_p = jax.random.split(key)

    # batch deliberately not a multiple of 16 to exercise the tail-padding path;
    # batch >= 32 also exercises the 2-step grid used for v7x megacore.
    batch, input_size = 50, 32
    x = jax.random.normal(k_x, (batch, input_size), jnp.float32)
    params = make_params(k_p, input_size)

    out = classifier_forward(x, params)
    out = jax.block_until_ready(out)

    ref = reference_forward(x, params)
    assert out.shape == (batch, 2)
    # Tolerance covers rare 1-ulp bf16 rounding flips of intermediate
    # activations (MXU vs XLA f32 accumulation order); typical diff is ~1e-6.
    assert bool(jnp.allclose(out, ref, atol=5e-3, rtol=5e-3)), "mismatch vs reference"

    print("KERNEL_OK")
</pallas_src>

<mosaic_0001>
module attributes {stable_mosaic.version = 11 : i64} {
  func.func @mlp_kernel(%arg0: i32, %arg1: memref<32x32xbf16, #tpu.memory_space<vmem>>, %arg2: memref<32x10xbf16, #tpu.memory_space<vmem>>, %arg3: memref<1x10xf32, #tpu.memory_space<vmem>>, %arg4: memref<10x10xbf16, #tpu.memory_space<vmem>>, %arg5: memref<1x10xf32, #tpu.memory_space<vmem>>, %arg6: memref<10x10xbf16, #tpu.memory_space<vmem>>, %arg7: memref<1x10xf32, #tpu.memory_space<vmem>>, %arg8: memref<10x10xbf16, #tpu.memory_space<vmem>>, %arg9: memref<1x10xf32, #tpu.memory_space<vmem>>, %arg10: memref<10x2xbf16, #tpu.memory_space<vmem>>, %arg11: memref<1x2xf32, #tpu.memory_space<vmem>>, %arg12: memref<32x2xf32, #tpu.memory_space<vmem>>) attributes {dimension_semantics = [#tpu.dimension_semantics<parallel>], iteration_bounds = array<i64: 2>, scalar_prefetch = 0 : i64, scratch_operands = 0 : i64, tpu.core_type = #tpu.core_type<tc>, window_params = [{transform_indices = @transform_0, window_bounds = array<i64: 32, 32>}, {pipeline_mode = #tpu.pipeline_mode<synchronous>, transform_indices = @transform_1, window_bounds = array<i64: 32, 10>}, {pipeline_mode = #tpu.pipeline_mode<synchronous>, transform_indices = @transform_2, window_bounds = array<i64: 1, 10>}, {pipeline_mode = #tpu.pipeline_mode<synchronous>, transform_indices = @transform_3, window_bounds = array<i64: 10, 10>}, {pipeline_mode = #tpu.pipeline_mode<synchronous>, transform_indices = @transform_4, window_bounds = array<i64: 1, 10>}, {pipeline_mode = #tpu.pipeline_mode<synchronous>, transform_indices = @transform_5, window_bounds = array<i64: 10, 10>}, {pipeline_mode = #tpu.pipeline_mode<synchronous>, transform_indices = @transform_6, window_bounds = array<i64: 1, 10>}, {pipeline_mode = #tpu.pipeline_mode<synchronous>, transform_indices = @transform_7, window_bounds = array<i64: 10, 10>}, {pipeline_mode = #tpu.pipeline_mode<synchronous>, transform_indices = @transform_8, window_bounds = array<i64: 1, 10>}, {pipeline_mode = #tpu.pipeline_mode<synchronous>, transform_indices = @transform_9, window_bounds = array<i64: 10, 2>}, {pipeline_mode = #tpu.pipeline_mode<synchronous>, transform_indices = @transform_10, window_bounds = array<i64: 1, 2>}, {transform_indices = @transform_11, window_bounds = array<i64: 32, 2>}]} {
    %c0 = arith.constant 0 : index
    %c0_0 = arith.constant 0 : index
    %0 = vector.load %arg1[%c0, %c0_0] : memref<32x32xbf16, #tpu.memory_space<vmem>>, vector<32x32xbf16>
    %c0_1 = arith.constant 0 : index
    %c0_2 = arith.constant 0 : index
    %1 = vector.load %arg2[%c0_1, %c0_2] : memref<32x10xbf16, #tpu.memory_space<vmem>>, vector<32x10xbf16>
    %cst = arith.constant dense<0.000000e+00> : vector<32x10xf32>
    %2 = tpu.matmul %0, %1, %cst {dimension_numbers = #tpu.dot_dimension_numbers<[1], [0], [0], [1], [0, 0, 1, 1], [], []>} : vector<32x32xbf16>, vector<32x10xbf16>, vector<32x10xf32> -> vector<32x10xf32>
    %c0_3 = arith.constant 0 : index
    %c0_4 = arith.constant 0 : index
    %3 = vector.load %arg3[%c0_3, %c0_4] : memref<1x10xf32, #tpu.memory_space<vmem>>, vector<1x10xf32>
    %4 = vector.broadcast %3 : vector<1x10xf32> to vector<32x10xf32>
    %5 = arith.addf %2, %4 : vector<32x10xf32>
    %cst_5 = arith.constant 0.000000e+00 : f32
    %6 = vector.broadcast %cst_5 : f32 to vector<32x10xf32>
    %7 = arith.maximumf %5, %6 : vector<32x10xf32>
    %8 = arith.truncf %7 : vector<32x10xf32> to vector<32x10xbf16>
    %c0_6 = arith.constant 0 : index
    %c0_7 = arith.constant 0 : index
    %9 = vector.load %arg4[%c0_6, %c0_7] : memref<10x10xbf16, #tpu.memory_space<vmem>>, vector<10x10xbf16>
    %cst_8 = arith.constant dense<0.000000e+00> : vector<32x10xf32>
    %10 = tpu.matmul %8, %9, %cst_8 {dimension_numbers = #tpu.dot_dimension_numbers<[1], [0], [0], [1], [0, 0, 1, 1], [], []>} : vector<32x10xbf16>, vector<10x10xbf16>, vector<32x10xf32> -> vector<32x10xf32>
    %c0_9 = arith.constant 0 : index
    %c0_10 = arith.constant 0 : index
    %11 = vector.load %arg5[%c0_9, %c0_10] : memref<1x10xf32, #tpu.memory_space<vmem>>, vector<1x10xf32>
    %12 = vector.broadcast %11 : vector<1x10xf32> to vector<32x10xf32>
    %13 = arith.addf %10, %12 : vector<32x10xf32>
    %cst_11 = arith.constant 0.000000e+00 : f32
    %14 = vector.broadcast %cst_11 : f32 to vector<32x10xf32>
    %15 = arith.maximumf %13, %14 : vector<32x10xf32>
    %16 = arith.truncf %15 : vector<32x10xf32> to vector<32x10xbf16>
    %c0_12 = arith.constant 0 : index
    %c0_13 = arith.constant 0 : index
    %17 = vector.load %arg6[%c0_12, %c0_13] : memref<10x10xbf16, #tpu.memory_space<vmem>>, vector<10x10xbf16>
    %cst_14 = arith.constant dense<0.000000e+00> : vector<32x10xf32>
    %18 = tpu.matmul %16, %17, %cst_14 {dimension_numbers = #tpu.dot_dimension_numbers<[1], [0], [0], [1], [0, 0, 1, 1], [], []>} : vector<32x10xbf16>, vector<10x10xbf16>, vector<32x10xf32> -> vector<32x10xf32>
    %c0_15 = arith.constant 0 : index
    %c0_16 = arith.constant 0 : index
    %19 = vector.load %arg7[%c0_15, %c0_16] : memref<1x10xf32, #tpu.memory_space<vmem>>, vector<1x10xf32>
    %20 = vector.broadcast %19 : vector<1x10xf32> to vector<32x10xf32>
    %21 = arith.addf %18, %20 : vector<32x10xf32>
    %cst_17 = arith.constant 0.000000e+00 : f32
    %22 = vector.broadcast %cst_17 : f32 to vector<32x10xf32>
    %23 = arith.maximumf %21, %22 : vector<32x10xf32>
    %24 = arith.truncf %23 : vector<32x10xf32> to vector<32x10xbf16>
    %c0_18 = arith.constant 0 : index
    %c0_19 = arith.constant 0 : index
    %25 = vector.load %arg8[%c0_18, %c0_19] : memref<10x10xbf16, #tpu.memory_space<vmem>>, vector<10x10xbf16>
    %cst_20 = arith.constant dense<0.000000e+00> : vector<32x10xf32>
    %26 = tpu.matmul %24, %25, %cst_20 {dimension_numbers = #tpu.dot_dimension_numbers<[1], [0], [0], [1], [0, 0, 1, 1], [], []>} : vector<32x10xbf16>, vector<10x10xbf16>, vector<32x10xf32> -> vector<32x10xf32>
    %c0_21 = arith.constant 0 : index
    %c0_22 = arith.constant 0 : index
    %27 = vector.load %arg9[%c0_21, %c0_22] : memref<1x10xf32, #tpu.memory_space<vmem>>, vector<1x10xf32>
    %28 = vector.broadcast %27 : vector<1x10xf32> to vector<32x10xf32>
    %29 = arith.addf %26, %28 : vector<32x10xf32>
    %cst_23 = arith.constant 0.000000e+00 : f32
    %30 = vector.broadcast %cst_23 : f32 to vector<32x10xf32>
    %31 = arith.maximumf %29, %30 : vector<32x10xf32>
    %32 = arith.truncf %31 : vector<32x10xf32> to vector<32x10xbf16>
    %c0_24 = arith.constant 0 : index
    %c0_25 = arith.constant 0 : index
    %33 = vector.load %arg10[%c0_24, %c0_25] : memref<10x2xbf16, #tpu.memory_space<vmem>>, vector<10x2xbf16>
    %cst_26 = arith.constant dense<0.000000e+00> : vector<32x2xf32>
    %34 = tpu.matmul %32, %33, %cst_26 {dimension_numbers = #tpu.dot_dimension_numbers<[1], [0], [0], [1], [0, 0, 1, 1], [], []>} : vector<32x10xbf16>, vector<10x2xbf16>, vector<32x2xf32> -> vector<32x2xf32>
    %c0_27 = arith.constant 0 : index
    %c0_28 = arith.constant 0 : index
    %35 = vector.load %arg11[%c0_27, %c0_28] : memref<1x2xf32, #tpu.memory_space<vmem>>, vector<1x2xf32>
    %36 = vector.broadcast %35 : vector<1x2xf32> to vector<32x2xf32>
    %37 = arith.addf %34, %36 : vector<32x2xf32>
    %cst_29 = arith.constant dense<0xFF800000> : vector<32xf32>
    %38 = vector.multi_reduction <maximumf>, %37, %cst_29 [1] : vector<32x2xf32> to vector<32xf32>
    %39 = vector.shape_cast %38 : vector<32xf32> to vector<32x1xf32>
    %40 = vector.broadcast %39 : vector<32x1xf32> to vector<32x2xf32>
    %41 = arith.subf %37, %40 : vector<32x2xf32>
    %42 = math.exp %41 : vector<32x2xf32>
    %cst_30 = arith.constant dense<0.000000e+00> : vector<32xf32>
    %43 = vector.multi_reduction <add>, %42, %cst_30 [1] : vector<32x2xf32> to vector<32xf32>
    %44 = vector.shape_cast %43 : vector<32xf32> to vector<32x1xf32>
    %45 = math.log %44 : vector<32x1xf32>
    %46 = vector.broadcast %45 : vector<32x1xf32> to vector<32x2xf32>
    %47 = arith.subf %41, %46 : vector<32x2xf32>
    %c0_31 = arith.constant 0 : index
    %c0_32 = arith.constant 0 : index
    %48 = vector.load %arg12[%c0_31, %c0_32] : memref<32x2xf32, #tpu.memory_space<vmem>>, vector<32x2xf32>
    tpu.vector_store %arg12[%c0_31, %c0_32], %47 {strides = array<i32>} : memref<32x2xf32, #tpu.memory_space<vmem>>, vector<32x2xf32>,
    return
  }
  func.func @transform_0(%arg0: i32) -> (i32, i32) {
    %c0_i32 = arith.constant 0 : i32
    %c0_i32_0 = arith.constant 0 : i32
    return %arg0, %c0_i32 : i32, i32
  }
  func.func @transform_1(%arg0: i32) -> (i32, i32) {
    %c0_i32 = arith.constant 0 : i32
    %c0_i32_0 = arith.constant 0 : i32
    %c0_i32_1 = arith.constant 0 : i32
    return %c0_i32, %c0_i32_0 : i32, i32
  }
  func.func @transform_2(%arg0: i32) -> (i32, i32) {
    %c0_i32 = arith.constant 0 : i32
    %c0_i32_0 = arith.constant 0 : i32
    %c0_i32_1 = arith.constant 0 : i32
    return %c0_i32, %c0_i32_0 : i32, i32
  }
  func.func @transform_3(%arg0: i32) -> (i32, i32) {
    %c0_i32 = arith.constant 0 : i32
    %c0_i32_0 = arith.constant 0 : i32
    %c0_i32_1 = arith.constant 0 : i32
    return %c0_i32, %c0_i32_0 : i32, i32
  }
  func.func @transform_4(%arg0: i32) -> (i32, i32) {
    %c0_i32 = arith.constant 0 : i32
    %c0_i32_0 = arith.constant 0 : i32
    %c0_i32_1 = arith.constant 0 : i32
    return %c0_i32, %c0_i32_0 : i32, i32
  }
  func.func @transform_5(%arg0: i32) -> (i32, i32) {
    %c0_i32 = arith.constant 0 : i32
    %c0_i32_0 = arith.constant 0 : i32
    %c0_i32_1 = arith.constant 0 : i32
    return %c0_i32, %c0_i32_0 : i32, i32
  }
  func.func @transform_6(%arg0: i32) -> (i32, i32) {
    %c0_i32 = arith.constant 0 : i32
    %c0_i32_0 = arith.constant 0 : i32
    %c0_i32_1 = arith.constant 0 : i32
    return %c0_i32, %c0_i32_0 : i32, i32
  }
  func.func @transform_7(%arg0: i32) -> (i32, i32) {
    %c0_i32 = arith.constant 0 : i32
    %c0_i32_0 = arith.constant 0 : i32
    %c0_i32_1 = arith.constant 0 : i32
    return %c0_i32, %c0_i32_0 : i32, i32
  }
  func.func @transform_8(%arg0: i32) -> (i32, i32) {
    %c0_i32 = arith.constant 0 : i32
    %c0_i32_0 = arith.constant 0 : i32
    %c0_i32_1 = arith.constant 0 : i32
    return %c0_i32, %c0_i32_0 : i32, i32
  }
  func.func @transform_9(%arg0: i32) -> (i32, i32) {
    %c0_i32 = arith.constant 0 : i32
    %c0_i32_0 = arith.constant 0 : i32
    %c0_i32_1 = arith.constant 0 : i32
    return %c0_i32, %c0_i32_0 : i32, i32
  }
  func.func @transform_10(%arg0: i32) -> (i32, i32) {
    %c0_i32 = arith.constant 0 : i32
    %c0_i32_0 = arith.constant 0 : i32
    %c0_i32_1 = arith.constant 0 : i32
    return %c0_i32, %c0_i32_0 : i32, i32
  }
  func.func @transform_11(%arg0: i32) -> (i32, i32) {
    %c0_i32 = arith.constant 0 : i32
    %c0_i32_0 = arith.constant 0 : i32
    return %arg0, %c0_i32 : i32, i32
  }
}

</mosaic_0001>

<llo_original>
// kernel: tpu_custom_call.1
$region0: #{tpu_custom_call.1}
  #allocation0 [shape = 'u32[]', space=smem, size = 0x4, offset = 0x4, fixed_abs, tag = 'smem constant byte address 0x4 - core index']
  #allocation1 [shape = 'u32[144,128]{1,0:T(1,128)}', space=vmem, size = 0x12000, scoped, tag = 'internal scratch']
  %s0 = inlined_call_operand.vmem [shape: bf16[64,32], index: 0, kind: input, shape index: {}]
  %s1 = inlined_call_operand.vmem [shape: bf16[32,10], index: 1, kind: input, shape index: {}]
  %s2 = inlined_call_operand.vmem [shape: f32[1,10], index: 2, kind: input, shape index: {}]
  %s3 = inlined_call_operand.vmem [shape: bf16[10,10], index: 3, kind: input, shape index: {}]
  %s4 = inlined_call_operand.vmem [shape: f32[1,10], index: 4, kind: input, shape index: {}]
  %s5 = inlined_call_operand.vmem [shape: bf16[10,10], index: 5, kind: input, shape index: {}]
  %s6 = inlined_call_operand.vmem [shape: f32[1,10], index: 6, kind: input, shape index: {}]
  %s7 = inlined_call_operand.vmem [shape: bf16[10,10], index: 7, kind: input, shape index: {}]
  %s8 = inlined_call_operand.vmem [shape: f32[1,10], index: 8, kind: input, shape index: {}]
  %s9 = inlined_call_operand.vmem [shape: bf16[10,2], index: 9, kind: input, shape index: {}]
  %s10 = inlined_call_operand.vmem [shape: f32[1,2], index: 10, kind: input, shape index: {}]
  %s11 = inlined_call_operand.vmem [shape: f32[64,2], index: 11, kind: output, shape index: {}]
  %s12 = sld [smem:[#allocation0]]
  $region77: #{tpu_custom_call.1} parent=0
    _
  %s14 = ssub.s32 1, %s12
  %s15 = scalar_select 0, %s14, %s12
  loop: start=0, step=1, limit=4
  $region2: #{tpu_custom_call.1} parent=0 // loop_pre_header
    _
  $region3: #{tpu_custom_call.1} parent=0 // loop_header
    %s17 = sphi 0, %s21
    %p18 = scmp.ge.s32.totalorder %s17, 4
    %s27 = sphi 0, %s29
    %s30 = sphi 0, %s27
    %s31 = sphi 0, %s30
    %s47 = sphi 0, %s31
    %s51 = sphi 0, %s51
    %s53 = sphi 0, %s51
    %s54 = sphi 0, %s53
    %s68 = sphi 0, %s54
    %s72 = sphi 0, %s72
    %s74 = sphi 0, %s72
    %s75 = sphi 0, %s74
    %s89 = sphi 0, %s75
    %s93 = sphi 0, %s93
    %s95 = sphi 0, %s93
    %s96 = sphi 0, %s95
    %s110 = sphi 0, %s96
    %s114 = sphi 0, %s114
    %s116 = sphi 0, %s114
    %s117 = sphi 0, %s116
    %s131 = sphi 0, %s117
    %s135 = sphi 0, %s135
    %s137 = sphi 0, %s135
    %s138 = sphi 0, %s137
    %s152 = sphi 0, %s138
    %s156 = sphi 0, %s156
    %s158 = sphi 0, %s156
    %s159 = sphi 0, %s158
    %s173 = sphi 0, %s159
    %s177 = sphi 0, %s177
    %s179 = sphi 0, %s177
    %s180 = sphi 0, %s179
    %s194 = sphi 0, %s180
    %s198 = sphi 0, %s198
    %s200 = sphi 0, %s198
    %s201 = sphi 0, %s200
    %s215 = sphi 0, %s201
    %s219 = sphi 0, %s219
    %s221 = sphi 0, %s219
    %s222 = sphi 0, %s221
    %s236 = sphi 0, %s222
    %s240 = sphi 0, %s240
    %s242 = sphi 0, %s240
    %s243 = sphi 0, %s242
    %s257 = sphi 0, %s243
    %s263 = sphi 0, %s265
    %s266 = sphi 0, %s263
    %s267 = sphi 0, %s266
    %s283 = sphi 0, %s267
  $region4: #{tpu_custom_call.1} parent=0 // loop_header_branch
    %20 = sbr.rel (%p18) target = $region8
  $region5: #{tpu_custom_call.1} parent=0 // loop_body
    %s22 = ssub.s32 %s17, 1
    %s23 = ssub.s32 %s17, 2
    %s24 = sadd.s32 %s17, 1
    %s25 = ssub.s32 %s17, %s24
    %p26 = scmp.eq.s32.totalorder %s25, 0
    %s28 = sadd.s32 %s27, 1
    %s29 = scalar_select %p26, %s27, %s28
    %p32 = pneg %p26
    %p33 = scmp.eq.s32.totalorder %s17, 1
    %p34 = por %p32, %p33
    %p35 = scmp.ne.s32.totalorder %s27, %s30
    %p36 = scmp.eq.s32.totalorder %s17, 0
    %p37 = por %p35, %p36
    %p38 = scmp.ne.s32.totalorder %s27, %s30
    %p39 = scmp.eq.s32.totalorder %s22, 1
    %p40 = por %p38, %p39
    %p41 = scmp.ne.s32.totalorder %s30, %s31
    %p42 = scmp.eq.s32.totalorder %s22, 0
    %p43 = por %p41, %p42
    %p44 = scmp.ne.s32.totalorder %s30, %s31
    %p45 = scmp.eq.s32.totalorder %s23, 1
    %p46 = por %p44, %p45
    %p48 = scmp.ne.s32.totalorder %s31, %s47
    %p49 = scmp.eq.s32.totalorder %s23, 0
    %p50 = por %p48, %p49
    %s52 = sadd.s32 %s51, 1
    %p55 = scmp.eq.s32.totalorder %s17, 1
    %p56 = scmp.ne.s32.totalorder %s51, %s53
    %p57 = scmp.eq.s32.totalorder %s17, 0
    %p58 = por %p56, %p57
    %p59 = scmp.ne.s32.totalorder %s51, %s53
    %p60 = scmp.eq.s32.totalorder %s22, 1
    %p61 = por %p59, %p60
    %p62 = scmp.ne.s32.totalorder %s53, %s54
    %p63 = scmp.eq.s32.totalorder %s22, 0
    %p64 = por %p62, %p63
    %p65 = scmp.ne.s32.totalorder %s53, %s54
    %p66 = scmp.eq.s32.totalorder %s23, 1
    %p67 = por %p65, %p66
    %p69 = scmp.ne.s32.totalorder %s54, %s68
    %p70 = scmp.eq.s32.totalorder %s23, 0
    %p71 = por %p69, %p70
    %s73 = sadd.s32 %s72, 1
    %p76 = scmp.eq.s32.totalorder %s17, 1
    %p77 = scmp.ne.s32.totalorder %s72, %s74
    %p78 = scmp.eq.s32.totalorder %s17, 0
    %p79 = por %p77, %p78
    %p80 = scmp.ne.s32.totalorder %s72, %s74
    %p81 = scmp.eq.s32.totalorder %s22, 1
    %p82 = por %p80, %p81
    %p83 = scmp.ne.s32.totalorder %s74, %s75
    %p84 = scmp.eq.s32.totalorder %s22, 0
    %p85 = por %p83, %p84
    %p86 = scmp.ne.s32.totalorder %s74, %s75
    %p87 = scmp.eq.s32.totalorder %s23, 1
    %p88 = por %p86, %p87
    %p90 = scmp.ne.s32.totalorder %s75, %s89
    %p91 = scmp.eq.s32.totalorder %s23, 0
    %p92 = por %p90, %p91
    %s94 = sadd.s32 %s93, 1
    %p97 = scmp.eq.s32.totalorder %s17, 1
    %p98 = scmp.ne.s32.totalorder %s93, %s95
    %p99 = scmp.eq.s32.totalorder %s17, 0
    %p100 = por %p98, %p99
    %p101 = scmp.ne.s32.totalorder %s93, %s95
    %p102 = scmp.eq.s32.totalorder %s22, 1
    %p103 = por %p101, %p102
    %p104 = scmp.ne.s32.totalorder %s95, %s96
    %p105 = scmp.eq.s32.totalorder %s22, 0
    %p106 = por %p104, %p105
    %p107 = scmp.ne.s32.totalorder %s95, %s96
    %p108 = scmp.eq.s32.totalorder %s23, 1
    %p109 = por %p107, %p108
    %p111 = scmp.ne.s32.totalorder %s96, %s110
    %p112 = scmp.eq.s32.totalorder %s23, 0
    %p113 = por %p111, %p112
    %s115 = sadd.s32 %s114, 1
    %p118 = scmp.eq.s32.totalorder %s17, 1
    %p119 = scmp.ne.s32.totalorder %s114, %s116
    %p120 = scmp.eq.s32.totalorder %s17, 0
    %p121 = por %p119, %p120
    %p122 = scmp.ne.s32.totalorder %s114, %s116
    %p123 = scmp.eq.s32.totalorder %s22, 1
    %p124 = por %p122, %p123
    %p125 = scmp.ne.s32.totalorder %s116, %s117
    %p126 = scmp.eq.s32.totalorder %s22, 0
    %p127 = por %p125, %p126
    %p128 = scmp.ne.s32.totalorder %s116, %s117
    %p129 = scmp.eq.s32.totalorder %s23, 1
    %p130 = por %p128, %p129
    %p132 = scmp.ne.s32.totalorder %s117, %s131
    %p133 = scmp.eq.s32.totalorder %s23, 0
    %p134 = por %p132, %p133
    %s136 = sadd.s32 %s135, 1
    %p139 = scmp.eq.s32.totalorder %s17, 1
    %p140 = scmp.ne.s32.totalorder %s135, %s137
    %p141 = scmp.eq.s32.totalorder %s17, 0
    %p142 = por %p140, %p141
    %p143 = scmp.ne.s32.totalorder %s135, %s137
    %p144 = scmp.eq.s32.totalorder %s22, 1
    %p145 = por %p143, %p144
    %p146 = scmp.ne.s32.totalorder %s137, %s138
    %p147 = scmp.eq.s32.totalorder %s22, 0
    %p148 = por %p146, %p147
    %p149 = scmp.ne.s32.totalorder %s137, %s138
    %p150 = scmp.eq.s32.totalorder %s23, 1
    %p151 = por %p149, %p150
    %p153 = scmp.ne.s32.totalorder %s138, %s152
    %p154 = scmp.eq.s32.totalorder %s23, 0
    %p155 = por %p153, %p154
    %s157 = sadd.s32 %s156, 1
    %p160 = scmp.eq.s32.totalorder %s17, 1
    %p161 = scmp.ne.s32.totalorder %s156, %s158
    %p162 = scmp.eq.s32.totalorder %s17, 0
    %p163 = por %p161, %p162
    %p164 = scmp.ne.s32.totalorder %s156, %s158
    %p165 = scmp.eq.s32.totalorder %s22, 1
    %p166 = por %p164, %p165
    %p167 = scmp.ne.s32.totalorder %s158, %s159
    %p168 = scmp.eq.s32.totalorder %s22, 0
    %p169 = por %p167, %p168
    %p170 = scmp.ne.s32.totalorder %s158, %s159
    %p171 = scmp.eq.s32.totalorder %s23, 1
    %p172 = por %p170, %p171
    %p174 = scmp.ne.s32.totalorder %s159, %s173
    %p175 = scmp.eq.s32.totalorder %s23, 0
    %p176 = por %p174, %p175
    %s178 = sadd.s32 %s177, 1
    %p181 = scmp.eq.s32.totalorder %s17, 1
    %p182 = scmp.ne.s32.totalorder %s177, %s179
    %p183 = scmp.eq.s32.totalorder %s17, 0
    %p184 = por %p182, %p183
    %p185 = scmp.ne.s32.totalorder %s177, %s179
    %p186 = scmp.eq.s32.totalorder %s22, 1
    %p187 = por %p185, %p186
    %p188 = scmp.ne.s32.totalorder %s179, %s180
    %p189 = scmp.eq.s32.totalorder %s22, 0
    %p190 = por %p188, %p189
    %p191 = scmp.ne.s32.totalorder %s179, %s180
    %p192 = scmp.eq.s32.totalorder %s23, 1
    %p193 = por %p191, %p192
    %p195 = scmp.ne.s32.totalorder %s180, %s194
    %p196 = scmp.eq.s32.totalorder %s23, 0
    %p197 = por %p195, %p196
    %s199 = sadd.s32 %s198, 1
    %p202 = scmp.eq.s32.totalorder %s17, 1
    %p203 = scmp.ne.s32.totalorder %s198, %s200
    %p204 = scmp.eq.s32.totalorder %s17, 0
    %p205 = por %p203, %p204
    %p206 = scmp.ne.s32.totalorder %s198, %s200
    %p207 = scmp.eq.s32.totalorder %s22, 1
    %p208 = por %p206, %p207
    %p209 = scmp.ne.s32.totalorder %s200, %s201
    %p210 = scmp.eq.s32.totalorder %s22, 0
    %p211 = por %p209, %p210
    %p212 = scmp.ne.s32.totalorder %s200, %s201
    %p213 = scmp.eq.s32.totalorder %s23, 1
    %p214 = por %p212, %p213
    %p216 = scmp.ne.s32.totalorder %s201, %s215
    %p217 = scmp.eq.s32.totalorder %s23, 0
    %p218 = por %p216, %p217
    %s220 = sadd.s32 %s219, 1
    %p223 = scmp.eq.s32.totalorder %s17, 1
    %p224 = scmp.ne.s32.totalorder %s219, %s221
    %p225 = scmp.eq.s32.totalorder %s17, 0
    %p226 = por %p224, %p225
    %p227 = scmp.ne.s32.totalorder %s219, %s221
    %p228 = scmp.eq.s32.totalorder %s22, 1
    %p229 = por %p227, %p228
    %p230 = scmp.ne.s32.totalorder %s221, %s222
    %p231 = scmp.eq.s32.totalorder %s22, 0
    %p232 = por %p230, %p231
    %p233 = scmp.ne.s32.totalorder %s221, %s222
    %p234 = scmp.eq.s32.totalorder %s23, 1
    %p235 = por %p233, %p234
    %p237 = scmp.ne.s32.totalorder %s222, %s236
    %p238 = scmp.eq.s32.totalorder %s23, 0
    %p239 = por %p237, %p238
    %s241 = sadd.s32 %s240, 1
    %p244 = scmp.eq.s32.totalorder %s17, 1
    %p245 = scmp.ne.s32.totalorder %s240, %s242
    %p246 = scmp.eq.s32.totalorder %s17, 0
    %p247 = por %p245, %p246
    %p248 = scmp.ne.s32.totalorder %s240, %s242
    %p249 = scmp.eq.s32.totalorder %s22, 1
    %p250 = por %p248, %p249
    %p251 = scmp.ne.s32.totalorder %s242, %s243
    %p252 = scmp.eq.s32.totalorder %s22, 0
    %p253 = por %p251, %p252
    %p254 = scmp.ne.s32.totalorder %s242, %s243
    %p255 = scmp.eq.s32.totalorder %s23, 1
    %p256 = por %p254, %p255
    %p258 = scmp.ne.s32.totalorder %s243, %s257
    %p259 = scmp.eq.s32.totalorder %s23, 0
    %p260 = por %p258, %p259
    %s261 = ssub.s32 %s17, %s24
    %p262 = scmp.eq.s32.totalorder %s261, 0
    %s264 = sadd.s32 %s263, 1
    %s265 = scalar_select %p262, %s263, %s264
    %p268 = pneg %p262
    %p269 = scmp.eq.s32.totalorder %s17, 1
    %p270 = por %p268, %p269
    %p271 = scmp.ne.s32.totalorder %s263, %s266
    %p272 = scmp.eq.s32.totalorder %s17, 0
    %p273 = por %p271, %p272
    %p274 = scmp.ne.s32.totalorder %s263, %s266
    %p275 = scmp.eq.s32.totalorder %s22, 1
    %p276 = por %p274, %p275
    %p277 = scmp.ne.s32.totalorder %s266, %s267
    %p278 = scmp.eq.s32.totalorder %s22, 0
    %p279 = por %p277, %p278
    %p280 = scmp.ne.s32.totalorder %s266, %s267
    %p281 = scmp.eq.s32.totalorder %s23, 1
    %p282 = por %p280, %p281
    %p284 = scmp.ne.s32.totalorder %s267, %s283
    %p285 = scmp.eq.s32.totalorder %s23, 0
    %p286 = por %p284, %p285
    %p287 = scmp.le.s32.totalorder 1, %s17
    %p288 = scmp.lt.s32.totalorder %s17, 3
    %p289 = pnand %p287, %p288
    %p290 = pneg %p289
    // Predicated region
    $region9: #{tpu_custom_call.1} parent=5 // pred_check
      _
    $region10: #{tpu_custom_call.1} parent=5 // pred_check_branch
      %292 = sbr.rel (%p289) target = $region12
    $region11: #{tpu_custom_call.1} parent=5 // pred_region
      %s293 = ssub.s32 %s17, 1
      // Predicated region
      $region13: #{tpu_custom_call.1} parent=11 // pred_check
        %p294 = pneg %p64
      $region14: #{tpu_custom_call.1} parent=11 // pred_check_branch
        %296 = sbr.rel (%p294) target = $region16
      $region15: #{tpu_custom_call.1} parent=11 // pred_region
        _
      $region16: #{tpu_custom_call.1} parent=11 // pred_fallthru
        _
      // Predicated region
      $region17: #{tpu_custom_call.1} parent=11 // pred_check
        %p297 = pneg %p85
      $region18: #{tpu_custom_call.1} parent=11 // pred_check_branch
        %299 = sbr.rel (%p297) target = $region20
      $region19: #{tpu_custom_call.1} parent=11 // pred_region
        _
      $region20: #{tpu_custom_call.1} parent=11 // pred_fallthru
        _
      // Predicated region
      $region21: #{tpu_custom_call.1} parent=11 // pred_check
        %p300 = pneg %p106
      $region22: #{tpu_custom_call.1} parent=11 // pred_check_branch
        %302 = sbr.rel (%p300) target = $region24
      $region23: #{tpu_custom_call.1} parent=11 // pred_region
        _
      $region24: #{tpu_custom_call.1} parent=11 // pred_fallthru
        _
      // Predicated region
      $region25: #{tpu_custom_call.1} parent=11 // pred_check
        %p303 = pneg %p127
      $region26: #{tpu_custom_call.1} parent=11 // pred_check_branch
        %305 = sbr.rel (%p303) target = $region28
      $region27: #{tpu_custom_call.1} parent=11 // pred_region
        _
      $region28: #{tpu_custom_call.1} parent=11 // pred_fallthru
        _
      // Predicated region
      $region29: #{tpu_custom_call.1} parent=11 // pred_check
        %p306 = pneg %p148
      $region30: #{tpu_custom_call.1} parent=11 // pred_check_branch
        %308 = sbr.rel (%p306) target = $region32
      $region31: #{tpu_custom_call.1} parent=11 // pred_region
        _
      $region32: #{tpu_custom_call.1} parent=11 // pred_fallthru
        _
      // Predicated region
      $region33: #{tpu_custom_call.1} parent=11 // pred_check
        %p309 = pneg %p169
      $region34: #{tpu_custom_call.1} parent=11 // pred_check_branch
        %311 = sbr.rel (%p309) target = $region36
      $region35: #{tpu_custom_call.1} parent=11 // pred_region
        _
      $region36: #{tpu_custom_call.1} parent=11 // pred_fallthru
        _
      // Predicated region
      $region37: #{tpu_custom_call.1} parent=11 // pred_check
        %p312 = pneg %p190
      $region38: #{tpu_custom_call.1} parent=11 // pred_check_branch
        %314 = sbr.rel (%p312) target = $region40
      $region39: #{tpu_custom_call.1} parent=11 // pred_region
        _
      $region40: #{tpu_custom_call.1} parent=11 // pred_fallthru
        _
      // Predicated region
      $region41: #{tpu_custom_call.1} parent=11 // pred_check
        %p315 = pneg %p211
      $region42: #{tpu_custom_call.1} parent=11 // pred_check_branch
        %317 = sbr.rel (%p315) target = $region44
      $region43: #{tpu_custom_call.1} parent=11 // pred_region
        _
      $region44: #{tpu_custom_call.1} parent=11 // pred_fallthru
        _
      // Predicated region
      $region45: #{tpu_custom_call.1} parent=11 // pred_check
        %p318 = pneg %p232
      $region46: #{tpu_custom_call.1} parent=11 // pred_check_branch
        %320 = sbr.rel (%p318) target = $region48
      $region47: #{tpu_custom_call.1} parent=11 // pred_region
        _
      $region48: #{tpu_custom_call.1} parent=11 // pred_fallthru
        _
      // Predicated region
      $region49: #{tpu_custom_call.1} parent=11 // pred_check
        %p321 = pneg %p253
      $region50: #{tpu_custom_call.1} parent=11 // pred_check_branch
        %323 = sbr.rel (%p321) target = $region52
      $region51: #{tpu_custom_call.1} parent=11 // pred_region
        _
      $region52: #{tpu_custom_call.1} parent=11 // pred_fallthru
        _
    $region12: #{tpu_custom_call.1} parent=5 // pred_fallthru
      _
    %p324 = scmp.lt.s32.totalorder %s17, 2
    // Predicated region
    $region53: #{tpu_custom_call.1} parent=5 // pred_check
      %p325 = pneg %p324
    $region54: #{tpu_custom_call.1} parent=5 // pred_check_branch
      %327 = sbr.rel (%p325) target = $region56
    $region55: #{tpu_custom_call.1} parent=5 // pred_region
      // Predicated region
      $region57: #{tpu_custom_call.1} parent=55 // pred_check
        %p328 = pneg %p37
      $region58: #{tpu_custom_call.1} parent=55 // pred_check_branch
        %330 = sbr.rel (%p328) target = $region60
      $region59: #{tpu_custom_call.1} parent=55 // pred_region
        %s331 = smul.u32 4, %s17
        %p332 = scmp.lt.s32.totalorder %s331, 7
        %s333 = scalar_select %p332, %s331, 7
        %s334 = smul.addr %s333, 4
        %s335 = scalar_lea.vmem %s0, %s334
        %s336 = smul.u32 4, %s17
      $region60: #{tpu_custom_call.1} parent=55 // pred_fallthru
        _
    $region56: #{tpu_custom_call.1} parent=5 // pred_fallthru
      _
    %p337 = scmp.le.s32.totalorder 1, %s17
    %p338 = scmp.lt.s32.totalorder %s17, 3
    %p339 = pnand %p337, %p338
    %p340 = pneg %p339
    // Predicated region
    $region61: #{tpu_custom_call.1} parent=5 // pred_check
      _
    $region62: #{tpu_custom_call.1} parent=5 // pred_check_branch
      %342 = sbr.rel (%p339) target = $region64
    $region63: #{tpu_custom_call.1} parent=5 // pred_region
      %s343 = ssub.s32 %s17, 1
      %s344 = smul.u32 4, %s22
      %p345 = scmp.lt.s32.totalorder %s344, 7
      %s346 = scalar_select %p345, %s344, 7
      %s347 = smul.addr %s346, 4
      %s348 = scalar_lea.vmem %s0, %s347
      %p349 = pneg %p43
      %p350 = pneg %p40
      %p351 = pneg %p64
      %p352 = pneg %p61
      %p353 = pneg %p85
      %p354 = pneg %p82
      %p355 = pneg %p106
      %p356 = pneg %p103
      %p357 = pneg %p127
      %p358 = pneg %p124
      %p359 = pneg %p148
      %p360 = pneg %p145
      %p361 = pneg %p169
      %p362 = pneg %p166
      %p363 = pneg %p190
      %p364 = pneg %p187
      %p365 = pneg %p211
      %p366 = pneg %p208
      %p367 = pneg %p232
      %p368 = pneg %p229
      %p369 = pneg %p253
      %p370 = pneg %p250
      %p371 = pneg %p279
      %p372 = pneg %p276
      %s373 = smul.u32 4, %s22
      %p374 = scmp.lt.s32.totalorder %s373, 7
      %s375 = scalar_select %p374, %s373, 7
      %s376 = smul.addr %s375, 8
      %s377 = scalar_lea.vmem %s11, %s376
      %s378 = smul.u32 4, %s22
      %p379 = scmp.lt.s32.totalorder %s378, 7
      %s380 = scalar_select %p379, %s378, 7
      %s381 = smul.addr %s380, 4
      %s382 = scalar_lea.vmem %s0, %s381
      %s383 = smul.u32 4, %s22
      %s384 = smul.u32 4, %s22
      %p385 = scmp.lt.s32.totalorder %s384, 7
      %s386 = scalar_select %p385, %s384, 7
      %s387 = smul.addr %s386, 8
      %s388 = scalar_lea.vmem %s11, %s387
      %s389 = smul.u32 4, %s22
      %v391 = vld [vmem:[%s382] sm:$0xf]
      %v392 = vld [vmem:[%s382 + $0x4] sm:$0xf]
      %v393 = vld [vmem:[%s382 + $0x8] sm:$0xf]
      %v394 = vld [vmem:[%s382 + $0xc] sm:$0xf]
      %v395 = vld [vmem:[%s1] sm:$0xf]
      %v396 = vld [vmem:[%s1 + $0x4] sm:$0xf]
      %v397 = vld [vmem:[%s1 + $0x8] sm:$0xf]
      %v398 = vld [vmem:[%s1 + $0xc] sm:$0xf]
      %v399 = vld [vmem:[%s2] sm:$0x1]
      %v401 = vlaneseq
      %v402 = vshrl.u32 %v401, 7
      %v403 = vsub.s32 0, %v402
      %v404 = vrot.slane %v399, %v403
      %v410 = vunpack.c.l.b16 %v391
      %v411 = vunpack.c.l.b16 %v392
      %v412 = vunpack.c.l.b16 %v393
      %v413 = vunpack.c.l.b16 %v394
      %v414 = vpack.c.b16 %v411, %v410
      %v415 = vpack.c.b16 %v413, %v412
      %v420 = vunpack.c.l.b16 %v395
      %v421 = vunpack.c.l.b16 %v396
      %v422 = vunpack.c.l.b16 %v397
      %v423 = vunpack.c.l.b16 %v398
      %v424 = vpack.c.b16 %v421, %v420
      %v425 = vpack.c.b16 %v423, %v422
      %vm428 = vcmask 261120
      %v430 = vsel %vm428, %v414, 0
      %v433 = vsel %vm428, %v415, 0
      %435 = vmatprep.subr.bf16.mxu0 0
      %436 = vmatpush1.bf16.msra.mxu0 %v424
      %437 = vmatprep.subr.bf16.mxu0 0
      %438 = vmatpush1.bf16.msra.mxu0 %v425
      %439 = vmatprep.subr.bf16.mxu0 0
      %440 = vmatpush1.bf16.msra.mxu0 0
      %441 = vmatprep.subr.bf16.mxu0 0
      %442 = vmatpush1.bf16.msra.mxu0 0
      %443 = vmatprep.subr.bf16.mxu0 0
      %444 = vmatpush1.bf16.msra.mxu0 0
      %445 = vmatprep.subr.bf16.mxu0 0
      %446 = vmatpush1.bf16.msra.mxu0 0
      %447 = vmatprep.subr.bf16.mxu0 0
      %448 = vmatpush1.bf16.msra.mxu0 0
      %449 = vmatprep.subr.bf16.mxu0 0
      %450 = vmatpush1.bf16.msra.mxu0 0
      %451 = vmatprep.subr.bf16.mxu0 0
      %452 = vmatpush1.bf16.msra.mxu0 0
      %453 = vmatprep.subr.bf16.mxu0 0
      %454 = vmatpush1.bf16.msra.mxu0 0
      %455 = vmatprep.subr.bf16.mxu0 0
      %456 = vmatpush1.bf16.msra.mxu0 0
      %457 = vmatprep.subr.bf16.mxu0 0
      %458 = vmatpush1.bf16.msra.mxu0 0
      %459 = vmatprep.subr.bf16.mxu0 0
      %460 = vmatpush1.bf16.msra.mxu0 0
      %461 = vmatprep.subr.bf16.mxu0 0
      %462 = vmatpush1.bf16.msra.mxu0 0
      %463 = vmatprep.subr.bf16.mxu0 0
      %464 = vmatpush1.bf16.msra.mxu0 0
      %465 = vmatprep.subr.bf16.mxu0 0
      %466 = vmatpush1.bf16.msra.mxu0 0
      %467 = vmatprep.mubr.bf16.mxu0 0
      %468 = vmatmul.mubr.bf16.gmra.mrb[0].mxu0 %v430
      %v469 = vpop.f32.mrb[0].mxu0
      %v470 = vadd.f32 %v404, %v469
      %v471 = vpop.f32.mrb[0].mxu0
      %v472 = vpop.f32.mrb[0].mxu0
      %v473 = vadd.f32 %v404, %v472
      %v474 = vpop.f32.mrb[0].mxu0
      %475 = vmatprep.mubr.bf16.mxu0 0
      %476 = vmatmul.mubr.bf16.gmra.mrb[0].mxu0 %v433
      %v477 = vpop.f32.mrb[0].mxu0
      %v478 = vadd.f32 %v404, %v477
      %v479 = vpop.f32.mrb[0].mxu0
      %v480 = vpop.f32.mrb[0].mxu0
      %v481 = vadd.f32 %v404, %v480
      %v482 = vpop.f32.mrb[0].mxu0
      %483 = vdwg.mxu0
      %v484 = vmax.f32 %v470, 0.0
      %v485 = vmax.f32 %v473, 0.0
      %v486 = vmax.f32 %v478, 0.0
      %v487 = vmax.f32 %v481, 0.0
      %v488 = vpack.c.bf16 %v485, %v484
      %v489 = vpack.c.bf16 %v487, %v486
      %v490 = vld [vmem:[%s3] sm:$0xf]
      %v491 = vld [vmem:[%s3 + $0x4] sm:$0x1]
      %v492 = vld [vmem:[%s4] sm:$0x1]
      %v494 = vlaneseq
      %v495 = vshrl.u32 %v494, 7
      %v496 = vsub.s32 0, %v495
      %v497 = vrot.slane %v492, %v496
      %v501 = vunpack.c.l.b16 %v490
      %v502 = vunpack.c.l.b16 %v491
      %v503 = vpack.c.b16 %v502, %v501
      %vm504 = vcmask 80896
      %v506 = vsel %vm504, %v488, 0
      %v509 = vsel %vm504, %v489, 0
      %vm511 = vcmask 1044480
      %v513 = vsel %vm511, %v503, 0
      %515 = vmatprep.subr.bf16.mxu0 0
      %516 = vmatpush1.bf16.msra.mxu0 %v513
      %517 = vmatprep.subr.bf16.mxu0 0
      %518 = vmatpush1.bf16.msra.mxu0 0
      %519 = vmatprep.subr.bf16.mxu0 0
      %520 = vmatpush1.bf16.msra.mxu0 0
      %521 = vmatprep.subr.bf16.mxu0 0
      %522 = vmatpush1.bf16.msra.mxu0 0
      %523 = vmatprep.subr.bf16.mxu0 0
      %524 = vmatpush1.bf16.msra.mxu0 0
      %525 = vmatprep.subr.bf16.mxu0 0
      %526 = vmatpush1.bf16.msra.mxu0 0
      %527 = vmatprep.subr.bf16.mxu0 0
      %528 = vmatpush1.bf16.msra.mxu0 0
      %529 = vmatprep.subr.bf16.mxu0 0
      %530 = vmatpush1.bf16.msra.mxu0 0
      %531 = vmatprep.subr.bf16.mxu0 0
      %532 = vmatpush1.bf16.msra.mxu0 0
      %533 = vmatprep.subr.bf16.mxu0 0
      %534 = vmatpush1.bf16.msra.mxu0 0
      %535 = vmatprep.subr.bf16.mxu0 0
      %536 = vmatpush1.bf16.msra.mxu0 0
      %537 = vmatprep.subr.bf16.mxu0 0
      %538 = vmatpush1.bf16.msra.mxu0 0
      %539 = vmatprep.subr.bf16.mxu0 0
      %540 = vmatpush1.bf16.msra.mxu0 0
      %541 = vmatprep.subr.bf16.mxu0 0
      %542 = vmatpush1.bf16.msra.mxu0 0
      %543 = vmatprep.subr.bf16.mxu0 0
      %544 = vmatpush1.bf16.msra.mxu0 0
      %545 = vmatprep.subr.bf16.mxu0 0
      %546 = vmatpush1.bf16.msra.mxu0 0
      %547 = vmatprep.mubr.bf16.mxu0 0
      %548 = vmatmul.mubr.bf16.gmra.mrb[0].mxu0 %v506
      %v549 = vpop.f32.mrb[0].mxu0
      %v550 = vadd.f32 %v497, %v549
      %v551 = vpop.f32.mrb[0].mxu0
      %v552 = vpop.f32.mrb[0].mxu0
      %v553 = vadd.f32 %v497, %v552
      %v554 = vpop.f32.mrb[0].mxu0
      %555 = vmatprep.mubr.bf16.mxu0 0
      %556 = vmatmul.mubr.bf16.gmra.mrb[0].mxu0 %v509
      %v557 = vpop.f32.mrb[0].mxu0
      %v558 = vadd.f32 %v497, %v557
      %v559 = vpop.f32.mrb[0].mxu0
      %v560 = vpop.f32.mrb[0].mxu0
      %v561 = vadd.f32 %v497, %v560
      %v562 = vpop.f32.mrb[0].mxu0
      %563 = vdwg.mxu0
      %v564 = vmax.f32 %v550, 0.0
      %v565 = vmax.f32 %v553, 0.0
      %v566 = vmax.f32 %v558, 0.0
      %v567 = vmax.f32 %v561, 0.0
      %v568 = vpack.c.bf16 %v565, %v564
      %v569 = vpack.c.bf16 %v567, %v566
      %v570 = vld [vmem:[%s5] sm:$0xf]
      %v571 = vld [vmem:[%s5 + $0x4] sm:$0x1]
      %v572 = vld [vmem:[%s6] sm:$0x1]
      %v574 = vlaneseq
      %v575 = vshrl.u32 %v574, 7
      %v576 = vsub.s32 0, %v575
      %v577 = vrot.slane %v572, %v576
      %v581 = vunpack.c.l.b16 %v570
      %v582 = vunpack.c.l.b16 %v571
      %v583 = vpack.c.b16 %v582, %v581
      %v585 = vsel %vm504, %v568, 0
      %v588 = vsel %vm504, %v569, 0
      %v591 = vsel %vm511, %v583, 0
      %593 = vmatprep.subr.bf16.mxu0 0
      %594 = vmatpush1.bf16.msra.mxu0 %v591
      %595 = vmatprep.subr.bf16.mxu0 0
      %596 = vmatpush1.bf16.msra.mxu0 0
      %597 = vmatprep.subr.bf16.mxu0 0
      %598 = vmatpush1.bf16.msra.mxu0 0
      %599 = vmatprep.subr.bf16.mxu0 0
      %600 = vmatpush1.bf16.msra.mxu0 0
      %601 = vmatprep.subr.bf16.mxu0 0
      %602 = vmatpush1.bf16.msra.mxu0 0
      %603 = vmatprep.subr.bf16.mxu0 0
      %604 = vmatpush1.bf16.msra.mxu0 0
      %605 = vmatprep.subr.bf16.mxu0 0
      %606 = vmatpush1.bf16.msra.mxu0 0
      %607 = vmatprep.subr.bf16.mxu0 0
      %608 = vmatpush1.bf16.msra.mxu0 0
      %609 = vmatprep.subr.bf16.mxu0 0
      %610 = vmatpush1.bf16.msra.mxu0 0
      %611 = vmatprep.subr.bf16.mxu0 0
      %612 = vmatpush1.bf16.msra.mxu0 0
      %613 = vmatprep.subr.bf16.mxu0 0
      %614 = vmatpush1.bf16.msra.mxu0 0
      %615 = vmatprep.subr.bf16.mxu0 0
      %616 = vmatpush1.bf16.msra.mxu0 0
      %617 = vmatprep.subr.bf16.mxu0 0
      %618 = vmatpush1.bf16.msra.mxu0 0
      %619 = vmatprep.subr.bf16.mxu0 0
      %620 = vmatpush1.bf16.msra.mxu0 0
      %621 = vmatprep.subr.bf16.mxu0 0
      %622 = vmatpush1.bf16.msra.mxu0 0
      %623 = vmatprep.subr.bf16.mxu0 0
      %624 = vmatpush1.bf16.msra.mxu0 0
      %625 = vmatprep.mubr.bf16.mxu0 0
      %626 = vmatmul.mubr.bf16.gmra.mrb[0].mxu0 %v585
      %v627 = vpop.f32.mrb[0].mxu0
      %v628 = vadd.f32 %v577, %v627
      %v629 = vpop.f32.mrb[0].mxu0
      %v630 = vpop.f32.mrb[0].mxu0
      %v631 = vadd.f32 %v577, %v630
      %v632 = vpop.f32.mrb[0].mxu0
      %633 = vmatprep.mubr.bf16.mxu0 0
      %634 = vmatmul.mubr.bf16.gmra.mrb[0].mxu0 %v588
      %v635 = vpop.f32.mrb[0].mxu0
      %v636 = vadd.f32 %v577, %v635
      %v637 = vpop.f32.mrb[0].mxu0
      %v638 = vpop.f32.mrb[0].mxu0
      %v639 = vadd.f32 %v577, %v638
      %v640 = vpop.f32.mrb[0].mxu0
      %641 = vdwg.mxu0
      %v642 = vmax.f32 %v628, 0.0
      %v643 = vmax.f32 %v631, 0.0
      %v644 = vmax.f32 %v636, 0.0
      %v645 = vmax.f32 %v639, 0.0
      %v646 = vpack.c.bf16 %v643, %v642
      %v647 = vpack.c.bf16 %v645, %v644
      %v648 = vld [vmem:[%s7] sm:$0xf]
      %v649 = vld [vmem:[%s7 + $0x4] sm:$0x1]
      %v650 = vld [vmem:[%s8] sm:$0x1]
      %v652 = vlaneseq
      %v653 = vshrl.u32 %v652, 7
      %v654 = vsub.s32 0, %v653
      %v655 = vrot.slane %v650, %v654
      %v659 = vunpack.c.l.b16 %v648
      %v660 = vunpack.c.l.b16 %v649
      %v661 = vpack.c.b16 %v660, %v659
      %v663 = vsel %vm504, %v646, 0
      %v666 = vsel %vm504, %v647, 0
      %v669 = vsel %vm511, %v661, 0
      %671 = vmatprep.subr.bf16.mxu0 0
      %672 = vmatpush1.bf16.msra.mxu0 %v669
      %673 = vmatprep.subr.bf16.mxu0 0
      %674 = vmatpush1.bf16.msra.mxu0 0
      %675 = vmatprep.subr.bf16.mxu0 0
      %676 = vmatpush1.bf16.msra.mxu0 0
      %677 = vmatprep.subr.bf16.mxu0 0
      %678 = vmatpush1.bf16.msra.mxu0 0
      %679 = vmatprep.subr.bf16.mxu0 0
      %680 = vmatpush1.bf16.msra.mxu0 0
      %681 = vmatprep.subr.bf16.mxu0 0
      %682 = vmatpush1.bf16.msra.mxu0 0
      %683 = vmatprep.subr.bf16.mxu0 0
      %684 = vmatpush1.bf16.msra.mxu0 0
      %685 = vmatprep.subr.bf16.mxu0 0
      %686 = vmatpush1.bf16.msra.mxu0 0
      %687 = vmatprep.subr.bf16.mxu0 0
      %688 = vmatpush1.bf16.msra.mxu0 0
      %689 = vmatprep.subr.bf16.mxu0 0
      %690 = vmatpush1.bf16.msra.mxu0 0
      %691 = vmatprep.subr.bf16.mxu0 0
      %692 = vmatpush1.bf16.msra.mxu0 0
      %693 = vmatprep.subr.bf16.mxu0 0
      %694 = vmatpush1.bf16.msra.mxu0 0
      %695 = vmatprep.subr.bf16.mxu0 0
      %696 = vmatpush1.bf16.msra.mxu0 0
      %697 = vmatprep.subr.bf16.mxu0 0
      %698 = vmatpush1.bf16.msra.mxu0 0
      %699 = vmatprep.subr.bf16.mxu0 0
      %700 = vmatpush1.bf16.msra.mxu0 0
      %701 = vmatprep.subr.bf16.mxu0 0
      %702 = vmatpush1.bf16.msra.mxu0 0
      %703 = vmatprep.mubr.bf16.mxu0 0
      %704 = vmatmul.mubr.bf16.gmra.mrb[0].mxu0 %v663
      %v705 = vpop.f32.mrb[0].mxu0
      %v706 = vadd.f32 %v655, %v705
      %v707 = vpop.f32.mrb[0].mxu0
      %v708 = vpop.f32.mrb[0].mxu0
      %v709 = vadd.f32 %v655, %v708
      %v710 = vpop.f32.mrb[0].mxu0
      %711 = vmatprep.mubr.bf16.mxu0 0
      %712 = vmatmul.mubr.bf16.gmra.mrb[0].mxu0 %v666
      %v713 = vpop.f32.mrb[0].mxu0
      %v714 = vadd.f32 %v655, %v713
      %v715 = vpop.f32.mrb[0].mxu0
      %v716 = vpop.f32.mrb[0].mxu0
      %v717 = vadd.f32 %v655, %v716
      %v718 = vpop.f32.mrb[0].mxu0
      %719 = vdwg.mxu0
      %v720 = vmax.f32 %v706, 0.0
      %v721 = vmax.f32 %v709, 0.0
      %v722 = vmax.f32 %v714, 0.0
      %v723 = vmax.f32 %v717, 0.0
      %v724 = vpack.c.bf16 %v721, %v720
      %v725 = vpack.c.bf16 %v723, %v722
      %v726 = vld [vmem:[%s9] sm:$0xf]
      %v727 = vld [vmem:[%s9 + $0x4] sm:$0x1]
      %v728 = vld [vmem:[%s10] sm:$0x1]
      %v730 = vlaneseq
      %v731 = vshrl.u32 %v730, 7
      %v732 = vsub.s32 0, %v731
      %v733 = vrot.slane %v728, %v732
      %v737 = vunpack.c.l.b16 %v726
      %v738 = vunpack.c.l.b16 %v727
      %v739 = vpack.c.b16 %v738, %v737
      %v741 = vsel %vm504, %v724, 0
      %v744 = vsel %vm504, %v725, 0
      %v747 = vsel %vm511, %v739, 0
      %749 = vmatprep.subr.bf16.mxu0 0
      %750 = vmatpush1.bf16.msra.mxu0 %v747
      %751 = vmatprep.subr.bf16.mxu0 0
      %752 = vmatpush1.bf16.msra.mxu0 0
      %753 = vmatprep.subr.bf16.mxu0 0
      %754 = vmatpush1.bf16.msra.mxu0 0
      %755 = vmatprep.subr.bf16.mxu0 0
      %756 = vmatpush1.bf16.msra.mxu0 0
      %757 = vmatprep.subr.bf16.mxu0 0
      %758 = vmatpush1.bf16.msra.mxu0 0
      %759 = vmatprep.subr.bf16.mxu0 0
      %760 = vmatpush1.bf16.msra.mxu0 0
      %761 = vmatprep.subr.bf16.mxu0 0
      %762 = vmatpush1.bf16.msra.mxu0 0
      %763 = vmatprep.subr.bf16.mxu0 0
      %764 = vmatpush1.bf16.msra.mxu0 0
      %765 = vmatprep.subr.bf16.mxu0 0
      %766 = vmatpush1.bf16.msra.mxu0 0
      %767 = vmatprep.subr.bf16.mxu0 0
      %768 = vmatpush1.bf16.msra.mxu0 0
      %769 = vmatprep.subr.bf16.mxu0 0
      %770 = vmatpush1.bf16.msra.mxu0 0
      %771 = vmatprep.subr.bf16.mxu0 0
      %772 = vmatpush1.bf16.msra.mxu0 0
      %773 = vmatprep.subr.bf16.mxu0 0
      %774 = vmatpush1.bf16.msra.mxu0 0
      %775 = vmatprep.subr.bf16.mxu0 0
      %776 = vmatpush1.bf16.msra.mxu0 0
      %777 = vmatprep.subr.bf16.mxu0 0
      %778 = vmatpush1.bf16.msra.mxu0 0
      %779 = vmatprep.subr.bf16.mxu0 0
      %780 = vmatpush1.bf16.msra.mxu0 0
      %781 = vmatprep.mubr.bf16.mxu0 0
      %782 = vmatmul.mubr.bf16.gmra.mrb[0].mxu0 %v741
      %v783 = vpop.f32.mrb[0].mxu0
      %v784 = vadd.f32 %v733, %v783
      %v785 = vpop.f32.mrb[0].mxu0
      %v786 = vpop.f32.mrb[0].mxu0
      %v787 = vadd.f32 %v733, %v786
      %v788 = vpop.f32.mrb[0].mxu0
      %789 = vmatprep.mubr.bf16.mxu0 0
      %790 = vmatmul.mubr.bf16.gmra.mrb[0].mxu0 %v744
      %v791 = vpop.f32.mrb[0].mxu0
      %v792 = vadd.f32 %v733, %v791
      %v793 = vpop.f32.mrb[0].mxu0
      %v794 = vpop.f32.mrb[0].mxu0
      %v795 = vadd.f32 %v733, %v794
      %v796 = vpop.f32.mrb[0].mxu0
      %797 = vdwg.mxu0
      %vm798 = vcmask 15360
      %v799 = vsel %vm798, %v784, -inf
      %800 = vmax.xlane.f32.xlu0 %v799
      %v801 = vpop.xlane.xlu0 %800
      %v802 = vsel %vm798, %v787, -inf
      %803 = vmax.xlane.f32.xlu0 %v802
      %v804 = vpop.xlane.xlu0 %803
      %v805 = vsel %vm798, %v792, -inf
      %806 = vmax.xlane.f32.xlu0 %v805
      %v807 = vpop.xlane.xlu0 %806
      %v808 = vsel %vm798, %v795, -inf
      %809 = vmax.xlane.f32.xlu0 %v808
      %v810 = vpop.xlane.xlu0 %809
      %v811 = vsub.f32 %v784, %v801
      %v812 = vsub.f32 %v787, %v804
      %v813 = vsub.f32 %v792, %v807
      %v814 = vsub.f32 %v795, %v810
      %v815 = vmul.f32 %v811, 1.442695
      %v816 = vpow.pop %v815
      %v817 = vmul.f32 %v812, 1.442695
      %v818 = vpow.pop %v817
      %v819 = vmul.f32 %v813, 1.442695
      %v820 = vpow.pop %v819
      %v821 = vmul.f32 %v814, 1.442695
      %v822 = vpow.pop %v821
      %v823 = vsel %vm798, %v816, 0.0
      %824 = vadd.xlane.f32.xlu0 %v823
      %v825 = vpop.xlane.xlu0 %824
      %v826 = vsel %vm798, %v818, 0.0
      %827 = vadd.xlane.f32.xlu0 %v826
      %v828 = vpop.xlane.xlu0 %827
      %v829 = vsel %vm798, %v820, 0.0
      %830 = vadd.xlane.f32.xlu0 %v829
      %v831 = vpop.xlane.xlu0 %830
      %v832 = vsel %vm798, %v822, 0.0
      %833 = vadd.xlane.f32.xlu0 %v832
      %v834 = vpop.xlane.xlu0 %833
      %v835 = vlog2.pop %v825
      %v836 = vmul.f32 %v835, 0.6931472
      %v837 = vlog2.pop %v828
      %v838 = vmul.f32 %v837, 0.6931472
      %v839 = vlog2.pop %v831
      %v840 = vmul.f32 %v839, 0.6931472
      %v841 = vlog2.pop %v834
      %v842 = vmul.f32 %v841, 0.6931472
      %v843 = vsub.f32 %v811, %v836
      %v844 = vsub.f32 %v812, %v838
      %v845 = vsub.f32 %v813, %v840
      %v846 = vsub.f32 %v814, %v842
      %847 = vst.msk [vmem:[%s388] sm:$0xff] %vm798, %v843
      %848 = vst.msk [vmem:[%s388 + $0x8] sm:$0xff] %vm798, %v844
      %849 = vst.msk [vmem:[%s388 + $0x10] sm:$0xff] %vm798, %v845
      %850 = vst.msk [vmem:[%s388 + $0x18] sm:$0xff] %vm798, %v846
      %s851 = smul.u32 4, %s22
      %p852 = scmp.lt.s32.totalorder %s851, 7
      %s853 = scalar_select %p852, %s851, 7
      %s854 = smul.addr %s853, 8
      %s855 = scalar_lea.vmem %s11, %s854
      // Predicated region
      $region65: #{tpu_custom_call.1} parent=63 // pred_check
        %p856 = pneg %p276
      $region66: #{tpu_custom_call.1} parent=63 // pred_check_branch
        %858 = sbr.rel (%p856) target = $region68
      $region67: #{tpu_custom_call.1} parent=63 // pred_region
        %s859 = smul.u32 4, %s22
      $region68: #{tpu_custom_call.1} parent=63 // pred_fallthru
        _
    $region64: #{tpu_custom_call.1} parent=5 // pred_fallthru
      _
    %p860 = scmp.le.s32.totalorder 2, %s17
    // Predicated region
    $region69: #{tpu_custom_call.1} parent=5 // pred_check
      %p861 = pneg %p860
    $region70: #{tpu_custom_call.1} parent=5 // pred_check_branch
      %863 = sbr.rel (%p861) target = $region72
    $region71: #{tpu_custom_call.1} parent=5 // pred_region
      %s864 = ssub.s32 %s17, 2
      // Predicated region
      $region73: #{tpu_custom_call.1} parent=71 // pred_check
        %p865 = pneg %p282
      $region74: #{tpu_custom_call.1} parent=71 // pred_check_branch
        %867 = sbr.rel (%p865) target = $region76
      $region75: #{tpu_custom_call.1} parent=71 // pred_region
        %s868 = smul.u32 4, %s23
        %p869 = scmp.lt.s32.totalorder %s868, 7
        %s870 = scalar_select %p869, %s868, 7
        %s871 = smul.addr %s870, 8
        %s872 = scalar_lea.vmem %s11, %s871
      $region76: #{tpu_custom_call.1} parent=71 // pred_fallthru
        _
    $region72: #{tpu_custom_call.1} parent=5 // pred_fallthru
      _
  $region6: #{tpu_custom_call.1} parent=0 // loop_footer
    %s21 = sadd.s32 1, %s17
  $region7: #{tpu_custom_call.1} parent=0 // loop_footer_branch
    %16 = sbr.rel target = $region3
  $region8: #{tpu_custom_call.1} parent=0 // loop_exit
    _

</llo_original>
